<compile_context>
chip_gen: v7x
topology: tpu7x:2x2x1
jax: 0.10.0
libtpu: 0.0.40
codegen_flags: <defaults>
</compile_context>

<pallas_src>
import functools

import jax
import jax.numpy as jnp
from jax import lax
from jax.experimental import pallas as pl
from jax.experimental.pallas import tpu as pltpu

_LANES = 128
_SUBLANES = 8
_SUB_ROWS = 512            # rows per inner fori_loop sub-slice (bounds vregs)
_MAX_BLOCK_ROWS = 8192     # 8192 * 128 * 4 B = 4 MiB per input per grid step


def _round_up(x, m):
    return ((x + m - 1) // m) * m


def _mse_partial_kernel(pred_ref, real_ref, out_ref, acc_ref, *,
                        total_rows, block_rows, sub_rows,
                        steps_per_chunk, n_blocks, has_tail, has_overhang):
    c = pl.program_id(0)           # parallel chunk axis (both TCs on v7x)
    i = pl.program_id(1)           # arbitrary reduction axis within the chunk
    b = c * steps_per_chunk + i    # global block index (may overhang n_blocks)

    @pl.when(i == 0)
    def _init():
        acc_ref[...] = jnp.zeros_like(acc_ref)

    n_sub = block_rows // sub_rows

    def sub_block(r0, masked):
        p = pred_ref[pl.ds(r0, sub_rows), :].astype(jnp.float32)
        r = real_ref[pl.ds(r0, sub_rows), :].astype(jnp.float32)
        d = r - p
        dd = d * d
        if masked:
            row_ids = (b * block_rows + r0
                       + lax.broadcasted_iota(jnp.int32, (sub_rows, _LANES), 0))
            dd = jnp.where(row_ids < total_rows, dd, 0.0)
        # Fold onto the vreg-shaped (8,128) accumulator with pure VPU adds;
        # the single cross-lane reduce happens in the JAX wrapper.
        acc_ref[...] += jnp.sum(
            dd.reshape(sub_rows // _SUBLANES, _SUBLANES, _LANES), axis=0)

    def accumulate(masked):
        if n_sub == 1:
            sub_block(0, masked)
        else:
            def body(s, carry):
                sub_block(pl.multiple_of(s * sub_rows, sub_rows), masked)
                return carry
            lax.fori_loop(0, n_sub, body, 0)

    # Only emit the branches that can actually trigger (static flags), so
    # steady-state iterations stay branch-free and mask-free.
    run_full = None
    run_tail = None
    if has_tail:
        is_tail = (b + 1) * block_rows > total_rows
        run_full = jnp.logical_not(is_tail)
        run_tail = is_tail
    if has_overhang:
        is_valid = b < n_blocks
        run_full = is_valid if run_full is None else jnp.logical_and(run_full, is_valid)
        if run_tail is not None:
            run_tail = jnp.logical_and(run_tail, is_valid)

    if run_full is None:
        accumulate(False)
    else:
        pl.when(run_full)(lambda: accumulate(False))
        if run_tail is not None:
            pl.when(run_tail)(lambda: accumulate(True))

    # Lane-dense (8,128) partial-sum output block; stays resident across i and
    # is written back to HBM once per chunk.
    out_ref[...] = acc_ref[...]


def mse(pred, real):
    """Pallas equivalent of MSE().forward(pred, real). Returns a scalar."""
    assert pred.shape == real.shape, "pred/real must have identical shapes"
    n = pred.size  # static numel

    p_flat = pred.reshape(-1)
    r_flat = real.reshape(-1)

    padded = _round_up(n, _LANES)
    if padded != n:
        # Rare case (numel not a multiple of 128): tiny zero pad; padded zeros
        # contribute 0 to the sum of squares.
        p_flat = jnp.pad(p_flat, (0, padded - n))
        r_flat = jnp.pad(r_flat, (0, padded - n))

    rows = padded // _LANES
    p2 = p_flat.reshape(rows, _LANES)
    r2 = r_flat.reshape(rows, _LANES)

    # Sublane multiple obeying the packed-tile rule: 8 rows for 4-byte dtypes,
    # 16 for bf16, 32 for 1-byte dtypes (driven by the narrowest input dtype).
    min_item = min(jnp.dtype(p2.dtype).itemsize, jnp.dtype(r2.dtype).itemsize)
    sublane_mult = _SUBLANES * max(1, 4 // max(1, min_item))

    if rows <= _SUB_ROWS:
        block_rows = _round_up(rows, sublane_mult)
        sub_rows = block_rows
    else:
        block_rows = min(_MAX_BLOCK_ROWS, _round_up(rows, _SUB_ROWS))
        sub_rows = _SUB_ROWS

    n_blocks = pl.cdiv(rows, block_rows)

    # Two chunks whenever there is more than one block so v7x's two
    # TensorCores both get work; odd block counts overhang by one grid step
    # which the kernel skips (its DMA block index is clamped to a valid one).
    num_chunks = 2 if n_blocks >= 2 else 1
    steps_per_chunk = pl.cdiv(n_blocks, num_chunks)
    has_overhang = num_chunks * steps_per_chunk != n_blocks
    has_tail = (rows % block_rows) != 0

    if has_overhang:
        def in_map(c, i):
            return (jnp.minimum(c * steps_per_chunk + i, n_blocks - 1), 0)
    else:
        def in_map(c, i):
            return (c * steps_per_chunk + i, 0)

    kernel = functools.partial(
        _mse_partial_kernel,
        total_rows=rows,
        block_rows=block_rows,
        sub_rows=sub_rows,
        steps_per_chunk=steps_per_chunk,
        n_blocks=n_blocks,
        has_tail=has_tail,
        has_overhang=has_overhang,
    )

    bytes_in = (jnp.dtype(p2.dtype).itemsize + jnp.dtype(r2.dtype).itemsize) * padded
    cost = pl.CostEstimate(
        flops=3 * n,                      # sub + mul + add per element
        transcendentals=0,
        bytes_accessed=bytes_in + num_chunks * _SUBLANES * _LANES * 4,
    )

    # NOTE(v7x): pipeline_mode=pl.Buffered(3) on the input specs is a possible
    # extra few-% win there (kept at default 2-deep for a single code path).
    partials = pl.pallas_call(
        kernel,
        out_shape=jax.ShapeDtypeStruct((num_chunks, _SUBLANES, _LANES),
                                       jnp.float32),
        grid_spec=pltpu.PrefetchScalarGridSpec(
            num_scalar_prefetch=0,
            grid=(num_chunks, steps_per_chunk),
            in_specs=[
                pl.BlockSpec((block_rows, _LANES), in_map),
                pl.BlockSpec((block_rows, _LANES), in_map),
            ],
            out_specs=pl.BlockSpec((None, _SUBLANES, _LANES),
                                   lambda c, i: (c, 0, 0)),
            scratch_shapes=[pltpu.VMEM((_SUBLANES, _LANES), jnp.float32)],
        ),
        compiler_params=pltpu.CompilerParams(
            dimension_semantics=("parallel", "arbitrary"),
            vmem_limit_bytes=40 * 1024 * 1024,
        ),
        cost_estimate=cost,
    )(p2, r2)

    # Tiny finish-up outside the kernel: cross-lane sum of the per-chunk
    # (8,128) partials and the 1/n scale.
    return jnp.sum(partials) / jnp.float32(n)


def _check(shape, key):
    kp, kr = jax.random.split(key)
    pred = jax.random.normal(kp, shape, dtype=jnp.float32)
    real = jax.random.normal(kr, shape, dtype=jnp.float32)
    got = mse(pred, real)
    jax.block_until_ready(got)
    ref = jnp.sum((real - pred) ** 2) / pred.size
    assert jnp.allclose(got, ref, rtol=1e-5, atol=1e-6), (shape, got, ref)


if __name__ == "__main__":
    key = jax.random.PRNGKey(0)
    k0, k1, k2, k3 = jax.random.split(key, 4)

    # Primary small NCHW-shaped example (batch=2, channels=4, spatial=16x16).
    _check((2, 4, 16, 16), k0)

    # Non-128-divisible numel: exercises the pad + tail-mask path.
    _check((2, 3, 17, 19), k1)

    # Multi-block path: two chunks, no tail, inner fori_loop over sub-slices.
    _check((2, 4, 512, 512), k2)

    # Odd block count: exercises the overhang-skip / clamped index_map path.
    _check((3, 4, 512, 512), k3)

    print("KERNEL_OK")
</pallas_src>

<mosaic_0001>
module attributes {stable_mosaic.version = 11 : i64} {
  func.func @_mse_partial_kernel(%arg0: i32, %arg1: i32, %arg2: memref<16x128xf32, #tpu.memory_space<vmem>>, %arg3: memref<16x128xf32, #tpu.memory_space<vmem>>, %arg4: memref<1x8x128xf32, #tpu.memory_space<vmem>>, %arg5: memref<8x128xf32, #tpu.memory_space<vmem>>) attributes {dimension_semantics = [#tpu.dimension_semantics<parallel>, #tpu.dimension_semantics<arbitrary>], iteration_bounds = array<i64: 1, 1>, scalar_prefetch = 0 : i64, scratch_operands = 1 : i64, tpu.core_type = #tpu.core_type<tc>, window_params = [{transform_indices = @transform_0, window_bounds = array<i64: 16, 128>}, {transform_indices = @transform_1, window_bounds = array<i64: 16, 128>}, {transform_indices = @transform_2, window_bounds = array<i64: 1, 8, 128>}]} {
    %c0_i32 = arith.constant 0 : i32
    %0 = arith.cmpi eq, %arg1, %c0_i32 : i32
    %1 = arith.extui %0 : i1 to i32
    %c0_i32_0 = arith.constant 0 : i32
    %2 = arith.cmpi ne, %1, %c0_i32_0 : i32
    scf.if %2 {
      %cst_13 = arith.constant 0.000000e+00 : f32
      %16 = vector.broadcast %cst_13 : f32 to vector<8x128xf32>
      %c0_14 = arith.constant 0 : index
      %c0_15 = arith.constant 0 : index
      %17 = vector.load %arg5[%c0_14, %c0_15] : memref<8x128xf32, #tpu.memory_space<vmem>>, vector<8x128xf32>
      tpu.vector_store %arg5[%c0_14, %c0_15], %16 {strides = array<i32>} : memref<8x128xf32, #tpu.memory_space<vmem>>, vector<8x128xf32>,
    } else {
    }
    %c0 = arith.constant 0 : index
    %c0_1 = arith.constant 0 : index
    %3 = vector.load %arg2[%c0, %c0_1] : memref<16x128xf32, #tpu.memory_space<vmem>>, vector<16x128xf32>
    %c0_2 = arith.constant 0 : index
    %c0_3 = arith.constant 0 : index
    %4 = vector.load %arg3[%c0_2, %c0_3] : memref<16x128xf32, #tpu.memory_space<vmem>>, vector<16x128xf32>
    %5 = arith.subf %4, %3 : vector<16x128xf32>
    %6 = arith.mulf %5, %5 : vector<16x128xf32>
    %c0_4 = arith.constant 0 : index
    %c0_5 = arith.constant 0 : index
    %7 = vector.load %arg5[%c0_4, %c0_5] : memref<8x128xf32, #tpu.memory_space<vmem>>, vector<8x128xf32>
    %8 = vector.shape_cast %6 : vector<16x128xf32> to vector<2x8x128xf32>
    %cst = arith.constant dense<0.000000e+00> : vector<8x128xf32>
    %9 = vector.multi_reduction <add>, %8, %cst [0] : vector<2x8x128xf32> to vector<8x128xf32>
    %10 = arith.addf %7, %9 : vector<8x128xf32>
    %c0_6 = arith.constant 0 : index
    %c0_7 = arith.constant 0 : index
    %11 = vector.load %arg5[%c0_6, %c0_7] : memref<8x128xf32, #tpu.memory_space<vmem>>, vector<8x128xf32>
    tpu.vector_store %arg5[%c0_6, %c0_7], %10 {strides = array<i32>} : memref<8x128xf32, #tpu.memory_space<vmem>>, vector<8x128xf32>,
    %c0_8 = arith.constant 0 : index
    %c0_9 = arith.constant 0 : index
    %12 = vector.load %arg5[%c0_8, %c0_9] : memref<8x128xf32, #tpu.memory_space<vmem>>, vector<8x128xf32>
    %c0_10 = arith.constant 0 : index
    %c0_11 = arith.constant 0 : index
    %c0_12 = arith.constant 0 : index
    %13 = vector.load %arg4[%c0_10, %c0_11, %c0_12] : memref<1x8x128xf32, #tpu.memory_space<vmem>>, vector<1x8x128xf32>
    %14 = vector.shape_cast %13 : vector<1x8x128xf32> to vector<8x128xf32>
    %15 = vector.shape_cast %12 : vector<8x128xf32> to vector<1x8x128xf32>
    tpu.vector_store %arg4[%c0_10, %c0_11, %c0_12], %15 {strides = array<i32>} : memref<1x8x128xf32, #tpu.memory_space<vmem>>, vector<1x8x128xf32>,
    return
  }
  func.func @transform_0(%arg0: i32, %arg1: i32) -> (i32, i32) {
    %c1_i32 = arith.constant 1 : i32
    %0 = arith.muli %arg0, %c1_i32 : i32
    %1 = arith.addi %0, %arg1 : i32
    %c0_i32 = arith.constant 0 : i32
    %c0_i32_0 = arith.constant 0 : i32
    return %1, %c0_i32 : i32, i32
  }
  func.func @transform_1(%arg0: i32, %arg1: i32) -> (i32, i32) {
    %c1_i32 = arith.constant 1 : i32
    %0 = arith.muli %arg0, %c1_i32 : i32
    %1 = arith.addi %0, %arg1 : i32
    %c0_i32 = arith.constant 0 : i32
    %c0_i32_0 = arith.constant 0 : i32
    return %1, %c0_i32 : i32, i32
  }
  func.func @transform_2(%arg0: i32, %arg1: i32) -> (i32, i32, i32) {
    %c0_i32 = arith.constant 0 : i32
    %c0_i32_0 = arith.constant 0 : i32
    %c0_i32_1 = arith.constant 0 : i32
    return %arg0, %c0_i32, %c0_i32_0 : i32, i32, i32
  }
}

</mosaic_0001>

<llo_original>
// kernel: tpu_custom_call.1
$region0: #{tpu_custom_call.1}
  #allocation0 [shape = 'u32[]', space=smem, size = 0x4, offset = 0x4, fixed_abs, tag = 'smem constant byte address 0x4 - core index']
  #allocation1 [shape = 'u32[144,128]{1,0:T(1,128)}', space=vmem, size = 0x12000, scoped, tag = 'internal scratch']
  #allocation2 [shape = 'f32[8,128]{1,0:T(8,128)}', space=vmem, size = 0x1000, scoped, tag = 'scratch operand']
  %s0 = inlined_call_operand.hbm [shape: f32[16,128], index: 0, kind: input, shape index: {}]
  %s1 = inlined_call_operand.hbm [shape: f32[16,128], index: 1, kind: input, shape index: {}]
  %s2 = inlined_call_operand.hbm [shape: f32[1,8,128], index: 2, kind: output, shape index: {}]
  %s3 = sld [smem:[#allocation0]]
  $region30: #{tpu_custom_call.1} parent=0
    _
  %s5 = ssub.s32 1, %s3
  %s6 = scalar_select 0, %s5, %s3
  $region1: #{tpu_custom_call.1} parent=0
    #allocation3 [shape = 'u8[8192]{0}', space=vmem, size = 0x2000, scoped, tag = 'input window, operand 0, single buffered']
    #allocation4 [shape = 's32[1]{0}', space=sflag, size = 0x4, scoped, tag = 'scoped memory for tpu_custom_call.1']
    #allocation5 [shape = 's32[1]{0}', space=sflag, size = 0x4, scoped, tag = 'scoped memory for tpu_custom_call.1']
    #allocation6 [shape = 'u8[8192]{0}', space=vmem, size = 0x2000, scoped, tag = 'input window, operand 1, single buffered']
    #allocation7 [shape = 's32[1]{0}', space=sflag, size = 0x4, scoped, tag = 'scoped memory for tpu_custom_call.1']
    #allocation8 [shape = 'u8[4096]{0}', space=vmem, size = 0x1000, scoped, tag = 'output window, operand 0, single buffered']
    %7 = vsyncpa [#allocation4], 0
    %8 = vsyncpa [#allocation7], 0
    %9 = vsyncpa [#allocation5], 0
    // Predicated region
    $region2: #{tpu_custom_call.1} parent=1 // pred_check
      _
    $region3: #{tpu_custom_call.1} parent=1 // pred_check_branch
      %11 = sbr.rel (0) target = $region5
    $region4: #{tpu_custom_call.1} parent=1 // pred_region
      %s12 = sadd.s32 0, 0
      %s13 = smul.u32 2, %s12
      %s15 = ssub.s32 256, 256
      %16 = vsyncadd [#allocation4], %s15
      %s17 = smul.addr %s13, 128
      %s18 = scalar_lea.hbm %s0, %s17
      %s19 = sshll.u32 [#allocation3], 4
      %s20 = int_to_ptr.vmem [resolvable:$true] %s19
      %25 = dma.hbm_to_vmem [thread:$0]  %s18, 256, %s20, [#allocation4], 128, 128, 8
    $region5: #{tpu_custom_call.1} parent=1 // pred_fallthru
      _
    // Predicated region
    $region6: #{tpu_custom_call.1} parent=1 // pred_check
      _
    $region7: #{tpu_custom_call.1} parent=1 // pred_check_branch
      %27 = sbr.rel (0) target = $region9
    $region8: #{tpu_custom_call.1} parent=1 // pred_region
      %s28 = sadd.s32 0, 0
      %s29 = smul.u32 2, %s28
      %s31 = ssub.s32 256, 256
      %32 = vsyncadd [#allocation7], %s31
      %s33 = smul.addr %s29, 128
      %s34 = scalar_lea.hbm %s1, %s33
      %s35 = sshll.u32 [#allocation6], 4
      %s36 = int_to_ptr.vmem [resolvable:$true] %s35
      %41 = dma.hbm_to_vmem [thread:$0]  %s34, 256, %s36, [#allocation7], 128, 128, 8
    $region9: #{tpu_custom_call.1} parent=1 // pred_fallthru
      _
    // Predicated region
    $region10: #{tpu_custom_call.1} parent=1 // pred_check
      _
    $region11: #{tpu_custom_call.1} parent=1 // pred_check_branch
      %43 = sbr.rel (0) target = $region13
    $region12: #{tpu_custom_call.1} parent=1 // pred_region
      %44 = dma.done [#allocation4], 256
    $region13: #{tpu_custom_call.1} parent=1 // pred_fallthru
      _
    // Predicated region
    $region14: #{tpu_custom_call.1} parent=1 // pred_check
      _
    $region15: #{tpu_custom_call.1} parent=1 // pred_check_branch
      %46 = sbr.rel (0) target = $region17
    $region16: #{tpu_custom_call.1} parent=1 // pred_region
      %47 = dma.done [#allocation7], 256
    $region17: #{tpu_custom_call.1} parent=1 // pred_fallthru
      _
    %s48 = sadd.s32 0, 0
    %s49 = smul.u32 2, %s48
    %s50 = sadd.s32 0, 0
    %s51 = smul.u32 2, %s50
    %p52 = scmp.eq.s32.totalorder 0, 0
    // Predicated region
    $region18: #{tpu_custom_call.1} parent=1 // pred_check
      %p53 = pneg %p52
    $region19: #{tpu_custom_call.1} parent=1 // pred_check_branch
      %55 = sbr.rel (%p53) target = $region21
    $region20: #{tpu_custom_call.1} parent=1 // pred_region
      %56 = vst [vmem:[#allocation2] sm:$0xff] 0.0
    $region21: #{tpu_custom_call.1} parent=1 // pred_fallthru
      _
    %v57 = vld [vmem:[#allocation3] sm:$0xff]
    %v58 = vld [vmem:[#allocation3 + $0x8] sm:$0xff]
    %v59 = vld [vmem:[#allocation6] sm:$0xff]
    %v60 = vld [vmem:[#allocation6 + $0x8] sm:$0xff]
    %v61 = vsub.f32 %v59, %v57
    %v62 = vsub.f32 %v60, %v58
    %v63 = vmul.f32 %v61, %v61
    %v64 = vmul.f32 %v62, %v62
    %v65 = vld [vmem:[#allocation2] sm:$0xff]
    %v66 = vadd.f32 %v63, %v64
    %v67 = vadd.f32 %v65, %v66
    %68 = vst [vmem:[#allocation2] sm:$0xff] %v67
    %v69 = vld [vmem:[#allocation2] sm:$0xff]
    %70 = vst [vmem:[#allocation8] sm:$0xff] %v69
    // Predicated region
    $region22: #{tpu_custom_call.1} parent=1 // pred_check
      _
    $region23: #{tpu_custom_call.1} parent=1 // pred_check_branch
      %72 = sbr.rel (0) target = $region25
    $region24: #{tpu_custom_call.1} parent=1 // pred_region
      %s74 = ssub.s32 128, 128
      %75 = vsyncadd [#allocation5], %s74
      %s77 = sshll.u32 [#allocation8], 4
      %s78 = int_to_ptr.vmem [resolvable:$true] %s77
      %80 = dma.vmem_to_hbm [thread:$0]  %s78, 128, %s2, [#allocation5]
    $region25: #{tpu_custom_call.1} parent=1 // pred_fallthru
      _
    // Predicated region
    $region26: #{tpu_custom_call.1} parent=1 // pred_check
      _
    $region27: #{tpu_custom_call.1} parent=1 // pred_check_branch
      %82 = sbr.rel (0) target = $region29
    $region28: #{tpu_custom_call.1} parent=1 // pred_region
      %83 = dma.done [#allocation5], 128
    $region29: #{tpu_custom_call.1} parent=1 // pred_fallthru
      _
    %84 = vsyncpa [#allocation4], 1
    %85 = vsyncpa [#allocation7], 1
    %86 = vsyncpa [#allocation5], 1

</llo_original>
